<compile_context>
chip_gen: v6e
topology: v6e:2x2x1
jax: 0.10.0
libtpu: 0.0.40
codegen_flags: <defaults>
</compile_context>

<pallas_src>
import jax
import jax.numpy as jnp
from jax.experimental import pallas as pl
from jax.experimental.pallas import tpu as pltpu

_LANES = 128
_SUBLANES = 8
# Below ~1 MiB of f32, a fused XLA elementwise op beats a standalone custom call.
_MIN_PALLAS_ELEMS = 256 * 1024


def _offset_relu_kernel(offset_ref, x_ref, o_ref):
    """Elementwise: o = max(0, x - offset). Offset is an SMEM f32 scalar."""
    x = x_ref[...]
    off = offset_ref[0]
    if jnp.issubdtype(x_ref.dtype, jnp.floating):
        # Compute in f32 so the offset is not rounded to a narrow input dtype.
        y = jnp.maximum(x.astype(jnp.float32) - off, 0.0)
    else:
        y = jnp.maximum(x - off.astype(x.dtype), 0)
    o_ref[...] = y.astype(o_ref.dtype)


def _offset_relu_jnp(x, offset):
    """Reference / fast-path implementation (fusable by XLA)."""
    if jnp.issubdtype(x.dtype, jnp.floating):
        off = jnp.asarray(offset, dtype=jnp.float32)
        return jnp.maximum(x.astype(jnp.float32) - off, 0.0).astype(x.dtype)
    off = jnp.asarray(offset, dtype=x.dtype)
    return jnp.maximum(x - off, jnp.zeros((), x.dtype))


def _tpu_generation():
    try:
        kind = jax.devices()[0].device_kind.lower()
    except Exception:
        return 6
    for g in (7, 6, 5, 4):
        if f"v{g}" in kind:
            return g
    return 6


def _block_config(gen):
    """(max_block_rows, min_grid_steps, vmem_limit_bytes or None) per generation."""
    if gen >= 7:
        # 4 MiB f32 blocks; double-buffered in+out = 16 MiB << 64 MiB VMEM.
        # >=2 grid steps so the 'parallel' axis shards across both TensorCores.
        return 8192, 2, 48 * 1024 * 1024
    # v6e: 2 MiB blocks already sit at ~85% of HBM roofline; bigger buys ~1%.
    # v5e: 2 MiB blocks keep double-buffered footprint inside the 16 MiB default.
    return 4096, 1, None


def _round_up(v, m):
    return ((v + m - 1) // m) * m


def _pick_block_rows(rows, max_rows, min_steps):
    """Choose block rows: multiple of 8 (or full extent), >= min_steps grid steps."""
    if rows < 2 * _SUBLANES:
        return rows  # cannot split into two aligned blocks; full-extent block
    steps = max(min_steps, pl.cdiv(rows, max_rows))
    if steps <= 1:
        return rows
    br = min(_round_up(pl.cdiv(rows, steps), _SUBLANES), max_rows)
    if br >= rows:
        return rows
    return br


def offset_relu(x, offset, *, block_rows=None, use_pallas=None, donate_input=False):
    """y = max(0, x - offset), elementwise, matching OffsetReLU.forward."""
    orig_shape = x.shape
    orig_dtype = x.dtype
    n = x.size

    if use_pallas is None:
        use_pallas = n >= _MIN_PALLAS_ELEMS
    if n == 0 or not use_pallas:
        return _offset_relu_jnp(x, offset)

    x_flat = jnp.reshape(x, (-1,))
    n_main = (n // _LANES) * _LANES
    if n_main == 0:
        # Fewer than 128 elements: not worth a custom call.
        return _offset_relu_jnp(x, offset)

    gen = _tpu_generation()
    max_rows, min_steps, vmem_limit = _block_config(gen)

    # Lane-dense main slab (metadata-only reshape for contiguous row-major x).
    main_flat = x_flat if n_main == n else jax.lax.slice(x_flat, (0,), (n_main,))
    rows = n_main // _LANES
    x2d = jnp.reshape(main_flat, (rows, _LANES))

    if block_rows is None:
        br = _pick_block_rows(rows, max_rows, min_steps)
    else:
        br = min(int(block_rows), rows)
        if br < rows:
            br = min(_round_up(br, _SUBLANES), rows)

    grid = (pl.cdiv(rows, br),)  # ragged final block handled by Pallas masking

    off_arr = jnp.asarray(offset, dtype=jnp.float32).reshape((1,))

    cp_kwargs = dict(dimension_semantics=("parallel",))
    if vmem_limit is not None:
        cp_kwargs["vmem_limit_bytes"] = vmem_limit

    call_kwargs = {}
    if donate_input:
        # Alias x2d (input #1) to the output: halves peak HBM footprint when the
        # caller donates x. Traffic is still 1 read + 1 write either way.
        call_kwargs["input_output_aliases"] = {1: 0}

    y2d = pl.pallas_call(
        _offset_relu_kernel,
        out_shape=jax.ShapeDtypeStruct((rows, _LANES), orig_dtype),
        grid_spec=pltpu.PrefetchScalarGridSpec(
            num_scalar_prefetch=0,
            grid=grid,
            in_specs=[
                pl.BlockSpec(memory_space=pltpu.MemorySpace.SMEM),  # offset scalar
                pl.BlockSpec((br, _LANES), lambda i: (i, 0)),
            ],
            out_specs=pl.BlockSpec((br, _LANES), lambda i: (i, 0)),
        ),
        compiler_params=pltpu.CompilerParams(**cp_kwargs),
        **call_kwargs,
    )(off_arr, x2d)

    y_flat = jnp.reshape(y2d, (-1,))
    if n_main != n:
        # <=127-element ragged tail handled with plain jnp (no full-array pad pass).
        # TODO(synk): the concatenate re-copies the main slab; acceptable for the
        # rare non-lane-aligned case.
        tail = _offset_relu_jnp(x_flat[n_main:], offset)
        y_flat = jnp.concatenate([y_flat, tail])
    return jnp.reshape(y_flat, orig_shape)


if __name__ == "__main__":
    key = jax.random.PRNGKey(0)
    # NCHW activation map, small shape consistent with the module's usage.
    x = jax.random.normal(key, (2, 4, 16, 16), dtype=jnp.float32)
    offset = 0.5  # module constructor arg

    y_ref = jnp.maximum(jnp.zeros_like(x), x - offset)

    # Force the Pallas path (small demo inputs would otherwise take the fused
    # XLA fast path).
    y = jax.block_until_ready(offset_relu(x, offset, use_pallas=True))
    assert y.shape == x.shape and y.dtype == x.dtype
    assert jnp.array_equal(y, y_ref)

    # Auto-dispatch path (small input -> jnp fast path) must match too.
    y_auto = jax.block_until_ready(offset_relu(x, offset))
    assert jnp.array_equal(y_auto, y_ref)

    # Multi-block grid with a ragged final block (rows=24, block=16).
    x3 = jax.random.normal(jax.random.PRNGKey(0), (3, 8, 128), dtype=jnp.float32)
    y3 = jax.block_until_ready(offset_relu(x3, -0.25, use_pallas=True, block_rows=16))
    y3_ref = jnp.maximum(jnp.zeros_like(x3), x3 + 0.25)
    assert jnp.array_equal(y3, y3_ref)

    # Ragged-lane case (n % 128 != 0): kernel on the aligned slab + jnp tail.
    x4 = jax.random.normal(jax.random.PRNGKey(0), (5, 37), dtype=jnp.float32)
    y4 = jax.block_until_ready(offset_relu(x4, 0.1, use_pallas=True))
    y4_ref = jnp.maximum(jnp.zeros_like(x4), x4 - 0.1)
    assert jnp.array_equal(y4, y4_ref)

    print("KERNEL_OK")
</pallas_src>

<mosaic_0001>
module attributes {stable_mosaic.version = 11 : i64} {
  func.func @_offset_relu_kernel(%arg0: i32, %arg1: memref<1xf32, #tpu.memory_space<smem>>, %arg2: memref<16x128xf32, #tpu.memory_space<vmem>>, %arg3: memref<16x128xf32, #tpu.memory_space<vmem>>) attributes {dimension_semantics = [#tpu.dimension_semantics<parallel>], iteration_bounds = array<i64: 1>, scalar_prefetch = 0 : i64, scratch_operands = 0 : i64, tpu.core_type = #tpu.core_type<tc>, window_params = [{transform_indices = @transform_0, window_bounds = array<i64: 1>}, {transform_indices = @transform_1, window_bounds = array<i64: 16, 128>}, {transform_indices = @transform_2, window_bounds = array<i64: 16, 128>}]} {
    %c0 = arith.constant 0 : index
    %c0_0 = arith.constant 0 : index
    %0 = vector.load %arg2[%c0, %c0_0] : memref<16x128xf32, #tpu.memory_space<vmem>>, vector<16x128xf32>
    %c0_1 = arith.constant 0 : index
    %1 = memref.load %arg1[%c0_1] : memref<1xf32, #tpu.memory_space<smem>>
    %2 = vector.broadcast %1 : f32 to vector<16x128xf32>
    %3 = arith.subf %0, %2 : vector<16x128xf32>
    %cst = arith.constant 0.000000e+00 : f32
    %4 = vector.broadcast %cst : f32 to vector<16x128xf32>
    %5 = arith.maximumf %3, %4 : vector<16x128xf32>
    %c0_2 = arith.constant 0 : index
    %c0_3 = arith.constant 0 : index
    %6 = vector.load %arg3[%c0_2, %c0_3] : memref<16x128xf32, #tpu.memory_space<vmem>>, vector<16x128xf32>
    tpu.vector_store %arg3[%c0_2, %c0_3], %5 {strides = array<i32>} : memref<16x128xf32, #tpu.memory_space<vmem>>, vector<16x128xf32>,
    return
  }
  func.func @transform_0(%arg0: i32) -> i32 {
    %c0_i32 = arith.constant 0 : i32
    %c0_i32_0 = arith.constant 0 : i32
    return %c0_i32 : i32
  }
  func.func @transform_1(%arg0: i32) -> (i32, i32) {
    %c0_i32 = arith.constant 0 : i32
    %c0_i32_0 = arith.constant 0 : i32
    return %arg0, %c0_i32 : i32, i32
  }
  func.func @transform_2(%arg0: i32) -> (i32, i32) {
    %c0_i32 = arith.constant 0 : i32
    %c0_i32_0 = arith.constant 0 : i32
    return %arg0, %c0_i32 : i32, i32
  }
}

</mosaic_0001>

<llo_original>
// kernel: tpu_custom_call.1
$region0: #{tpu_custom_call.1}
  #allocation0 [shape = 'u32[]', space=smem, size = 0x4, offset = 0x4, fixed_abs, tag = 'smem constant byte address 0x4 - core index']
  #allocation1 [shape = 'u32[144,128]{1,0:T(1,128)}', space=vmem, size = 0x12000, scoped, tag = 'internal scratch']
  #allocation2 [shape = 'f32[1]{0:T(128)S(6)}', space=smem, size = 0x200, scoped, tag = 'scoped memory for tpu_custom_call.1']
  %s0 = inlined_call_operand.<no memory space> [shape: f32[1], index: 0, kind: input, shape index: {}]
  %s1 = inlined_call_operand.hbm [shape: f32[16,128], index: 1, kind: input, shape index: {}]
  %s2 = inlined_call_operand.hbm [shape: f32[16,128], index: 2, kind: output, shape index: {}]
  %s3 = sld [smem:[#allocation0]]
  $region22: #{tpu_custom_call.1} parent=0
    _
  %s5 = ssub.s32 1, %s3
  %s6 = scalar_select 0, %s5, %s3
  %7 = sst [smem:[#allocation2]] %s0
  $region1: #{tpu_custom_call.1} parent=0
    #allocation3 [shape = 'u8[8192]{0}', space=vmem, size = 0x2000, scoped, tag = 'input window, operand 1, single buffered']
    #allocation4 [shape = 's32[1]{0}', space=sflag, size = 0x4, scoped, tag = 'scoped memory for tpu_custom_call.1']
    #allocation5 [shape = 's32[1]{0}', space=sflag, size = 0x4, scoped, tag = 'scoped memory for tpu_custom_call.1']
    #allocation6 [shape = 'u8[8192]{0}', space=vmem, size = 0x2000, scoped, tag = 'output window, operand 0, single buffered']
    %8 = vsyncpa [#allocation4], 0
    %9 = vsyncpa [#allocation5], 0
    // Predicated region
    $region2: #{tpu_custom_call.1} parent=1 // pred_check
      _
    $region3: #{tpu_custom_call.1} parent=1 // pred_check_branch
      %11 = sbr.rel (0) target = $region5
    $region4: #{tpu_custom_call.1} parent=1 // pred_region
      _
    $region5: #{tpu_custom_call.1} parent=1 // pred_fallthru
      _
    // Predicated region
    $region6: #{tpu_custom_call.1} parent=1 // pred_check
      _
    $region7: #{tpu_custom_call.1} parent=1 // pred_check_branch
      %13 = sbr.rel (0) target = $region9
    $region8: #{tpu_custom_call.1} parent=1 // pred_region
      %s15 = ssub.s32 256, 256
      %16 = vsyncadd [#allocation4], %s15
      %s17 = sshll.u32 [#allocation3], 4
      %s18 = int_to_ptr.vmem [resolvable:$true] %s17
      %23 = dma.hbm_to_vmem [thread:$0]  %s1, 256, %s18, [#allocation4], 128, 128, 8
    $region9: #{tpu_custom_call.1} parent=1 // pred_fallthru
      _
    // Predicated region
    $region10: #{tpu_custom_call.1} parent=1 // pred_check
      _
    $region11: #{tpu_custom_call.1} parent=1 // pred_check_branch
      %25 = sbr.rel (0) target = $region13
    $region12: #{tpu_custom_call.1} parent=1 // pred_region
      %26 = dma.done [#allocation4], 256
    $region13: #{tpu_custom_call.1} parent=1 // pred_fallthru
      _
    %v27 = vld [vmem:[#allocation3] sm:$0xff]
    %v28 = vld [vmem:[#allocation3 + $0x8] sm:$0xff]
    %s29 = sld [smem:[#allocation2]]
    %v30 = vstv %s29
    %v31 = vsub.f32 %v27, %v30
    %v32 = vsub.f32 %v28, %v30
    %v33 = vmax.f32 %v31, 0.0
    %v34 = vmax.f32 %v32, 0.0
    %35 = vst [vmem:[#allocation6] sm:$0xff] %v33
    %36 = vst [vmem:[#allocation6 + $0x8] sm:$0xff] %v34
    // Predicated region
    $region14: #{tpu_custom_call.1} parent=1 // pred_check
      _
    $region15: #{tpu_custom_call.1} parent=1 // pred_check_branch
      %38 = sbr.rel (0) target = $region17
    $region16: #{tpu_custom_call.1} parent=1 // pred_region
      %s40 = ssub.s32 256, 256
      %41 = vsyncadd [#allocation5], %s40
      %s42 = sshll.u32 [#allocation6], 4
      %s43 = int_to_ptr.vmem [resolvable:$true] %s42
      %48 = dma.vmem_to_hbm [thread:$0]  %s43, 256, %s2, [#allocation5], 128, 128, 8
    $region17: #{tpu_custom_call.1} parent=1 // pred_fallthru
      _
    // Predicated region
    $region18: #{tpu_custom_call.1} parent=1 // pred_check
      _
    $region19: #{tpu_custom_call.1} parent=1 // pred_check_branch
      %50 = sbr.rel (0) target = $region21
    $region20: #{tpu_custom_call.1} parent=1 // pred_region
      %51 = dma.done [#allocation5], 256
    $region21: #{tpu_custom_call.1} parent=1 // pred_fallthru
      _
    %52 = vsyncpa [#allocation4], 1
    %53 = vsyncpa [#allocation5], 1

</llo_original>
